<compile_context>
chip_gen: v7x
topology: tpu7x:2x2x1
jax: 0.10.0
libtpu: 0.0.40
codegen_flags: <defaults>
</compile_context>

<pallas_src>
import functools

import jax
import jax.numpy as jnp
from jax.experimental import pallas as pl
from jax.experimental.pallas import tpu as pltpu

d_model = 128
d_ff = 512
LN_EPS = 1e-5


def _round_up(n: int, m: int) -> int:
    return ((n + m - 1) // m) * m


def ffn_kernel(x_ref, w1_ref, w2_ref, o_ref):
    # x_ref : [tm, d_model]   tile of token rows (input dtype: f32 or bf16)
    # w1_ref: [d_model, d_ff] resident whole weight
    # w2_ref: [d_ff, d_model] resident whole weight
    x = x_ref[...]

    # Matmuls in the stored dtype (bf16 runs on the native bf16 MXU path),
    # accumulation forced to f32 on the MXU.
    h = jnp.dot(x, w1_ref[...], preferred_element_type=jnp.float32)
    h = jnp.maximum(h, 0.0)
    y = jnp.dot(h.astype(w2_ref.dtype), w2_ref[...],
                preferred_element_type=jnp.float32)

    # Residual add + LayerNorm in f32 on the VPU/EUP
    # (biased variance, eps inside rsqrt, gamma=1, beta=0).
    y = y + x.astype(jnp.float32)
    mean = jnp.mean(y, axis=-1, keepdims=True)
    centered = y - mean
    var = jnp.mean(centered * centered, axis=-1, keepdims=True)
    inv = jax.lax.rsqrt(var + LN_EPS)
    o_ref[...] = (centered * inv).astype(o_ref.dtype)


@functools.partial(jax.jit, static_argnames=("tm",))
def poswise_ffn(x, w1, w2, *, tm=512):
    """x: [batch, seq, d_model]; w1: [d_model, d_ff]; w2: [d_ff, d_model]."""
    B, S, D = x.shape
    assert D == d_model
    M = B * S
    x2 = x.reshape(M, D)

    # Row tile: as large as requested (default 512 -> near-roofline MXU tiles)
    # but never larger than the 8-row-aligned problem size. Non-divisible M is
    # handled by zero-padding rows in the wrapper (padded rows are sliced off;
    # LayerNorm of a zero row is finite, so no NaNs propagate).
    tm_eff = _round_up(min(tm, _round_up(M, 8)), 8)
    M_pad = _round_up(M, tm_eff)
    if M_pad != M:
        x2 = jnp.pad(x2, ((0, M_pad - M), (0, 0)))

    out = pl.pallas_call(
        ffn_kernel,
        out_shape=jax.ShapeDtypeStruct((M_pad, D), x.dtype),
        grid_spec=pl.GridSpec(
            grid=(M_pad // tm_eff,),
            in_specs=[
                pl.BlockSpec((tm_eff, D), lambda i: (i, 0)),   # token rows tile
                pl.BlockSpec((D, d_ff), lambda i: (0, 0)),     # W1 resident
                pl.BlockSpec((d_ff, D), lambda i: (0, 0)),     # W2 resident
            ],
            out_specs=pl.BlockSpec((tm_eff, D), lambda i: (i, 0)),
        ),
        compiler_params=pltpu.CompilerParams(
            dimension_semantics=("parallel",)),
    )(x2, w1, w2)
    return out[:M].reshape(B, S, D)


def reference(x, w1, w2):
    x = x.astype(jnp.float32)
    w1 = w1.astype(jnp.float32)
    w2 = w2.astype(jnp.float32)
    h = jnp.maximum(jnp.einsum("bsd,df->bsf", x, w1), 0.0)
    y = jnp.einsum("bsf,fd->bsd", h, w2) + x
    mean = jnp.mean(y, axis=-1, keepdims=True)
    var = jnp.mean((y - mean) ** 2, axis=-1, keepdims=True)
    return (y - mean) / jnp.sqrt(var + LN_EPS)


if __name__ == "__main__":
    key = jax.random.PRNGKey(0)
    kx, k1, k2, kx2 = jax.random.split(key, 4)

    # Deterministic parameter init (kaiming-uniform-like scale, no bias).
    bound1 = 1.0 / (d_model ** 0.5)
    bound2 = 1.0 / (d_ff ** 0.5)
    w1 = jax.random.uniform(k1, (d_model, d_ff), jnp.float32, -bound1, bound1)
    w2 = jax.random.uniform(k2, (d_ff, d_model), jnp.float32, -bound2, bound2)

    # Case 1: small shape matching the module's usage (f32, tight tolerance).
    batch, seq = 2, 8
    x = jax.random.normal(kx, (batch, seq, d_model), dtype=jnp.float32)
    out = jax.block_until_ready(poswise_ffn(x, w1, w2))
    ref = reference(x, w1, w2)
    assert out.shape == (batch, seq, d_model)
    assert jnp.allclose(out, ref, atol=1e-4, rtol=1e-4), "f32 mismatch (small)"

    # Case 2: non-divisible M exercises the padded-tail + multi-step grid path.
    batch2, seq2 = 3, 70            # M = 210 -> padded to 256 with tm=128
    xb = jax.random.normal(kx2, (batch2, seq2, d_model), dtype=jnp.float32)
    out2 = jax.block_until_ready(poswise_ffn(xb, w1, w2, tm=128))
    ref2 = reference(xb, w1, w2)
    assert out2.shape == (batch2, seq2, d_model)
    assert jnp.allclose(out2, ref2, atol=1e-4, rtol=1e-4), "f32 mismatch (ragged)"

    # Case 3: bf16 activations/weights -> native bf16 MXU path, f32 accumulate.
    out_bf = jax.block_until_ready(
        poswise_ffn(xb.astype(jnp.bfloat16),
                    w1.astype(jnp.bfloat16),
                    w2.astype(jnp.bfloat16), tm=128))
    assert jnp.allclose(out_bf.astype(jnp.float32), ref2, atol=1e-1, rtol=1e-1), \
        "bf16 mismatch"

    print("KERNEL_OK")
</pallas_src>

<mosaic_0001>
module attributes {stable_mosaic.version = 11 : i64} {
  func.func @ffn_kernel(%arg0: i32, %arg1: memref<16x128xf32, #tpu.memory_space<vmem>>, %arg2: memref<128x512xf32, #tpu.memory_space<vmem>>, %arg3: memref<512x128xf32, #tpu.memory_space<vmem>>, %arg4: memref<16x128xf32, #tpu.memory_space<vmem>>) attributes {dimension_semantics = [#tpu.dimension_semantics<parallel>], iteration_bounds = array<i64: 1>, scalar_prefetch = 0 : i64, scratch_operands = 0 : i64, tpu.core_type = #tpu.core_type<tc>, window_params = [{transform_indices = @transform_0, window_bounds = array<i64: 16, 128>}, {pipeline_mode = #tpu.pipeline_mode<synchronous>, transform_indices = @transform_1, window_bounds = array<i64: 128, 512>}, {pipeline_mode = #tpu.pipeline_mode<synchronous>, transform_indices = @transform_2, window_bounds = array<i64: 512, 128>}, {transform_indices = @transform_3, window_bounds = array<i64: 16, 128>}]} {
    %c0 = arith.constant 0 : index
    %c0_0 = arith.constant 0 : index
    %0 = vector.load %arg1[%c0, %c0_0] : memref<16x128xf32, #tpu.memory_space<vmem>>, vector<16x128xf32>
    %c0_1 = arith.constant 0 : index
    %c0_2 = arith.constant 0 : index
    %1 = vector.load %arg2[%c0_1, %c0_2] : memref<128x512xf32, #tpu.memory_space<vmem>>, vector<128x512xf32>
    %cst = arith.constant dense<0.000000e+00> : vector<16x512xf32>
    %2 = tpu.matmul %0, %1, %cst {dimension_numbers = #tpu.dot_dimension_numbers<[1], [0], [0], [1], [0, 0, 1, 1], [], []>} : vector<16x128xf32>, vector<128x512xf32>, vector<16x512xf32> -> vector<16x512xf32>
    %cst_3 = arith.constant 0.000000e+00 : f32
    %3 = vector.broadcast %cst_3 : f32 to vector<16x512xf32>
    %4 = arith.maximumf %2, %3 : vector<16x512xf32>
    %c0_4 = arith.constant 0 : index
    %c0_5 = arith.constant 0 : index
    %5 = vector.load %arg3[%c0_4, %c0_5] : memref<512x128xf32, #tpu.memory_space<vmem>>, vector<512x128xf32>
    %cst_6 = arith.constant dense<0.000000e+00> : vector<16x128xf32>
    %6 = tpu.matmul %4, %5, %cst_6 {dimension_numbers = #tpu.dot_dimension_numbers<[1], [0], [0], [1], [0, 0, 1, 1], [], []>} : vector<16x512xf32>, vector<512x128xf32>, vector<16x128xf32> -> vector<16x128xf32>
    %7 = arith.addf %6, %0 : vector<16x128xf32>
    %cst_7 = arith.constant dense<0.000000e+00> : vector<16xf32>
    %8 = vector.multi_reduction <add>, %7, %cst_7 [1] : vector<16x128xf32> to vector<16xf32>
    %9 = vector.shape_cast %8 : vector<16xf32> to vector<16x1xf32>
    %cst_8 = arith.constant 1.280000e+02 : f32
    %10 = vector.broadcast %cst_8 : f32 to vector<16x1xf32>
    %11 = arith.divf %9, %10 : vector<16x1xf32>
    %12 = vector.broadcast %11 : vector<16x1xf32> to vector<16x128xf32>
    %13 = arith.subf %7, %12 : vector<16x128xf32>
    %14 = arith.mulf %13, %13 : vector<16x128xf32>
    %cst_9 = arith.constant dense<0.000000e+00> : vector<16xf32>
    %15 = vector.multi_reduction <add>, %14, %cst_9 [1] : vector<16x128xf32> to vector<16xf32>
    %16 = vector.shape_cast %15 : vector<16xf32> to vector<16x1xf32>
    %cst_10 = arith.constant 1.280000e+02 : f32
    %17 = vector.broadcast %cst_10 : f32 to vector<16x1xf32>
    %18 = arith.divf %16, %17 : vector<16x1xf32>
    %cst_11 = arith.constant 9.99999974E-6 : f32
    %19 = vector.broadcast %cst_11 : f32 to vector<16x1xf32>
    %20 = arith.addf %18, %19 : vector<16x1xf32>
    %21 = math.rsqrt %20 : vector<16x1xf32>
    %22 = vector.broadcast %21 : vector<16x1xf32> to vector<16x128xf32>
    %23 = arith.mulf %13, %22 : vector<16x128xf32>
    %c0_12 = arith.constant 0 : index
    %c0_13 = arith.constant 0 : index
    %24 = vector.load %arg4[%c0_12, %c0_13] : memref<16x128xf32, #tpu.memory_space<vmem>>, vector<16x128xf32>
    tpu.vector_store %arg4[%c0_12, %c0_13], %23 {strides = array<i32>} : memref<16x128xf32, #tpu.memory_space<vmem>>, vector<16x128xf32>,
    return
  }
  func.func @transform_0(%arg0: i32) -> (i32, i32) {
    %c0_i32 = arith.constant 0 : i32
    %c0_i32_0 = arith.constant 0 : i32
    return %arg0, %c0_i32 : i32, i32
  }
  func.func @transform_1(%arg0: i32) -> (i32, i32) {
    %c0_i32 = arith.constant 0 : i32
    %c0_i32_0 = arith.constant 0 : i32
    %c0_i32_1 = arith.constant 0 : i32
    return %c0_i32, %c0_i32_0 : i32, i32
  }
  func.func @transform_2(%arg0: i32) -> (i32, i32) {
    %c0_i32 = arith.constant 0 : i32
    %c0_i32_0 = arith.constant 0 : i32
    %c0_i32_1 = arith.constant 0 : i32
    return %c0_i32, %c0_i32_0 : i32, i32
  }
  func.func @transform_3(%arg0: i32) -> (i32, i32) {
    %c0_i32 = arith.constant 0 : i32
    %c0_i32_0 = arith.constant 0 : i32
    return %arg0, %c0_i32 : i32, i32
  }
}

</mosaic_0001>

<llo_original>
// kernel: poswise_ffn.1
$region0: #{poswise_ffn.1}
  #allocation0 [shape = 'u32[]', space=smem, size = 0x4, offset = 0x4, fixed_abs, tag = 'smem constant byte address 0x4 - core index']
  #allocation1 [shape = 'u32[144,128]{1,0:T(1,128)}', space=vmem, size = 0x12000, scoped, tag = 'internal scratch']
  %s0 = inlined_call_operand.hbm [shape: f32[16,128], index: 0, kind: input, shape index: {}]
  %s1 = inlined_call_operand.hbm [shape: f32[128,512], index: 1, kind: input, shape index: {}]
  %s2 = inlined_call_operand.hbm [shape: f32[512,128], index: 2, kind: input, shape index: {}]
  %s3 = inlined_call_operand.hbm [shape: f32[16,128], index: 3, kind: output, shape index: {}]
  %s4 = sld [smem:[#allocation0]]
  $region34: #{poswise_ffn.1} parent=0
    _
  %s6 = ssub.s32 1, %s4
  %s7 = scalar_select 0, %s6, %s4
  $region1: #{poswise_ffn.1} parent=0
    #allocation2 [shape = 'u8[8192]{0}', space=vmem, size = 0x2000, scoped, tag = 'input window, operand 0, single buffered']
    #allocation3 [shape = 's32[1]{0}', space=sflag, size = 0x4, scoped, tag = 'scoped memory for poswise_ffn.1']
    #allocation4 [shape = 's32[1]{0}', space=sflag, size = 0x4, scoped, tag = 'scoped memory for poswise_ffn.1']
    #allocation5 [shape = 'u8[262144]{0}', space=vmem, size = 0x40000, scoped, tag = 'input window, operand 1, single buffered']
    #allocation6 [shape = 's32[1]{0}', space=sflag, size = 0x4, scoped, tag = 'scoped memory for poswise_ffn.1']
    #allocation7 [shape = 'u8[262144]{0}', space=vmem, size = 0x40000, scoped, tag = 'input window, operand 2, single buffered']
    #allocation8 [shape = 'u8[8192]{0}', space=vmem, size = 0x2000, scoped, tag = 'output window, operand 0, single buffered']
    %8 = vsyncpa [#allocation3], 0
    %9 = vsyncpa [#allocation6], 0
    %10 = vsyncpa [#allocation4], 0
    // Predicated region
    $region2: #{poswise_ffn.1} parent=1 // pred_check
      _
    $region3: #{poswise_ffn.1} parent=1 // pred_check_branch
      %12 = sbr.rel (0) target = $region5
    $region4: #{poswise_ffn.1} parent=1 // pred_region
      %s14 = ssub.s32 256, 256
      %15 = vsyncadd [#allocation3], %s14
      %s16 = sshll.u32 [#allocation2], 4
      %s17 = int_to_ptr.vmem [resolvable:$true] %s16
      %22 = dma.hbm_to_vmem [thread:$0]  %s0, 256, %s17, [#allocation3], 128, 128, 8
    $region5: #{poswise_ffn.1} parent=1 // pred_fallthru
      _
    // Predicated region
    $region6: #{poswise_ffn.1} parent=1 // pred_check
      _
    $region7: #{poswise_ffn.1} parent=1 // pred_check_branch
      %24 = sbr.rel (0) target = $region9
    $region8: #{poswise_ffn.1} parent=1 // pred_region
      %s26 = ssub.s32 8192, 8192
      %27 = vsyncadd [#allocation6], %s26
      %s28 = sshll.u32 [#allocation5], 4
      %s29 = int_to_ptr.vmem [resolvable:$true] %s28
      %34 = dma.hbm_to_vmem [thread:$0]  %s1, 8192, %s29, [#allocation6], 512, 512, 32
    $region9: #{poswise_ffn.1} parent=1 // pred_fallthru
      _
    // Predicated region
    $region10: #{poswise_ffn.1} parent=1 // pred_check
      _
    $region11: #{poswise_ffn.1} parent=1 // pred_check_branch
      %36 = sbr.rel (0) target = $region13
    $region12: #{poswise_ffn.1} parent=1 // pred_region
      %s38 = ssub.s32 8192, 8192
      %39 = vsyncadd [#allocation6], %s38
      %s40 = sshll.u32 [#allocation7], 4
      %s41 = int_to_ptr.vmem [resolvable:$true] %s40
      %46 = dma.hbm_to_vmem [thread:$0]  %s2, 8192, %s41, [#allocation6], 128, 128, 8
    $region13: #{poswise_ffn.1} parent=1 // pred_fallthru
      _
    // Predicated region
    $region14: #{poswise_ffn.1} parent=1 // pred_check
      _
    $region15: #{poswise_ffn.1} parent=1 // pred_check_branch
      %48 = sbr.rel (0) target = $region17
    $region16: #{poswise_ffn.1} parent=1 // pred_region
      %49 = dma.done [#allocation3], 256
    $region17: #{poswise_ffn.1} parent=1 // pred_fallthru
      _
    // Predicated region
    $region18: #{poswise_ffn.1} parent=1 // pred_check
      _
    $region19: #{poswise_ffn.1} parent=1 // pred_check_branch
      %51 = sbr.rel (0) target = $region21
    $region20: #{poswise_ffn.1} parent=1 // pred_region
      %52 = dma.done [#allocation6], 8192
    $region21: #{poswise_ffn.1} parent=1 // pred_fallthru
      _
    // Predicated region
    $region22: #{poswise_ffn.1} parent=1 // pred_check
      _
    $region23: #{poswise_ffn.1} parent=1 // pred_check_branch
      %54 = sbr.rel (0) target = $region25
    $region24: #{poswise_ffn.1} parent=1 // pred_region
      %55 = dma.done [#allocation6], 8192
    $region25: #{poswise_ffn.1} parent=1 // pred_fallthru
      _
    %v56 = vld [vmem:[#allocation2] sm:$0xff]
    %v57 = vld [vmem:[#allocation2 + $0x8] sm:$0xff]
    %v58 = vld [vmem:[#allocation5] sm:$0xff]
    %v59 = vld [vmem:[#allocation5 + $0x8] sm:$0xff]
    %v60 = vld [vmem:[#allocation5 + $0x10] sm:$0xff]
    %v61 = vld [vmem:[#allocation5 + $0x18] sm:$0xff]
    %v62 = vld [vmem:[#allocation5 + $0x20] sm:$0xff]
    %v63 = vld [vmem:[#allocation5 + $0x28] sm:$0xff]
    %v64 = vld [vmem:[#allocation5 + $0x30] sm:$0xff]
    %v65 = vld [vmem:[#allocation5 + $0x38] sm:$0xff]
    %v66 = vld [vmem:[#allocation5 + $0x40] sm:$0xff]
    %v67 = vld [vmem:[#allocation5 + $0x48] sm:$0xff]
    %v68 = vld [vmem:[#allocation5 + $0x50] sm:$0xff]
    %v69 = vld [vmem:[#allocation5 + $0x58] sm:$0xff]
    %v70 = vld [vmem:[#allocation5 + $0x60] sm:$0xff]
    %v71 = vld [vmem:[#allocation5 + $0x68] sm:$0xff]
    %v72 = vld [vmem:[#allocation5 + $0x70] sm:$0xff]
    %v73 = vld [vmem:[#allocation5 + $0x78] sm:$0xff]
    %v74 = vld [vmem:[#allocation5 + $0x80] sm:$0xff]
    %v75 = vld [vmem:[#allocation5 + $0x88] sm:$0xff]
    %v76 = vld [vmem:[#allocation5 + $0x90] sm:$0xff]
    %v77 = vld [vmem:[#allocation5 + $0x98] sm:$0xff]
    %v78 = vld [vmem:[#allocation5 + $0xa0] sm:$0xff]
    %v79 = vld [vmem:[#allocation5 + $0xa8] sm:$0xff]
    %v80 = vld [vmem:[#allocation5 + $0xb0] sm:$0xff]
    %v81 = vld [vmem:[#allocation5 + $0xb8] sm:$0xff]
    %v82 = vld [vmem:[#allocation5 + $0xc0] sm:$0xff]
    %v83 = vld [vmem:[#allocation5 + $0xc8] sm:$0xff]
    %v84 = vld [vmem:[#allocation5 + $0xd0] sm:$0xff]
    %v85 = vld [vmem:[#allocation5 + $0xd8] sm:$0xff]
    %v86 = vld [vmem:[#allocation5 + $0xe0] sm:$0xff]
    %v87 = vld [vmem:[#allocation5 + $0xe8] sm:$0xff]
    %v88 = vld [vmem:[#allocation5 + $0xf0] sm:$0xff]
    %v89 = vld [vmem:[#allocation5 + $0xf8] sm:$0xff]
    %v90 = vld [vmem:[#allocation5 + $0x100] sm:$0xff]
    %v91 = vld [vmem:[#allocation5 + $0x108] sm:$0xff]
    %v92 = vld [vmem:[#allocation5 + $0x110] sm:$0xff]
    %v93 = vld [vmem:[#allocation5 + $0x118] sm:$0xff]
    %v94 = vld [vmem:[#allocation5 + $0x120] sm:$0xff]
    %v95 = vld [vmem:[#allocation5 + $0x128] sm:$0xff]
    %v96 = vld [vmem:[#allocation5 + $0x130] sm:$0xff]
    %v97 = vld [vmem:[#allocation5 + $0x138] sm:$0xff]
    %v98 = vld [vmem:[#allocation5 + $0x140] sm:$0xff]
    %v99 = vld [vmem:[#allocation5 + $0x148] sm:$0xff]
    %v100 = vld [vmem:[#allocation5 + $0x150] sm:$0xff]
    %v101 = vld [vmem:[#allocation5 + $0x158] sm:$0xff]
    %v102 = vld [vmem:[#allocation5 + $0x160] sm:$0xff]
    %v103 = vld [vmem:[#allocation5 + $0x168] sm:$0xff]
    %v104 = vld [vmem:[#allocation5 + $0x170] sm:$0xff]
    %v105 = vld [vmem:[#allocation5 + $0x178] sm:$0xff]
    %v106 = vld [vmem:[#allocation5 + $0x180] sm:$0xff]
    %v107 = vld [vmem:[#allocation5 + $0x188] sm:$0xff]
    %v108 = vld [vmem:[#allocation5 + $0x190] sm:$0xff]
    %v109 = vld [vmem:[#allocation5 + $0x198] sm:$0xff]
    %v110 = vld [vmem:[#allocation5 + $0x1a0] sm:$0xff]
    %v111 = vld [vmem:[#allocation5 + $0x1a8] sm:$0xff]
    %v112 = vld [vmem:[#allocation5 + $0x1b0] sm:$0xff]
    %v113 = vld [vmem:[#allocation5 + $0x1b8] sm:$0xff]
    %v114 = vld [vmem:[#allocation5 + $0x1c0] sm:$0xff]
    %v115 = vld [vmem:[#allocation5 + $0x1c8] sm:$0xff]
    %v116 = vld [vmem:[#allocation5 + $0x1d0] sm:$0xff]
    %v117 = vld [vmem:[#allocation5 + $0x1d8] sm:$0xff]
    %v118 = vld [vmem:[#allocation5 + $0x1e0] sm:$0xff]
    %v119 = vld [vmem:[#allocation5 + $0x1e8] sm:$0xff]
    %v120 = vld [vmem:[#allocation5 + $0x1f0] sm:$0xff]
    %v121 = vld [vmem:[#allocation5 + $0x1f8] sm:$0xff]
    %122 = vmatprep.subr.mxu0 %v59
    %123 = vmatpush1.msra.mxu0 %v58
    %124 = vmatprep.subr.mxu0 %v63
    %125 = vmatpush1.msra.mxu0 %v62
    %126 = vmatprep.subr.mxu0 %v67
    %127 = vmatpush1.msra.mxu0 %v66
    %128 = vmatprep.subr.mxu0 %v71
    %129 = vmatpush1.msra.mxu0 %v70
    %130 = vmatprep.subr.mxu0 %v75
    %131 = vmatpush1.msra.mxu0 %v74
    %132 = vmatprep.subr.mxu0 %v79
    %133 = vmatpush1.msra.mxu0 %v78
    %134 = vmatprep.subr.mxu0 %v83
    %135 = vmatpush1.msra.mxu0 %v82
    %136 = vmatprep.subr.mxu0 %v87
    %137 = vmatpush1.msra.mxu0 %v86
    %138 = vmatprep.subr.mxu0 %v91
    %139 = vmatpush1.msra.mxu0 %v90
    %140 = vmatprep.subr.mxu0 %v95
    %141 = vmatpush1.msra.mxu0 %v94
    %142 = vmatprep.subr.mxu0 %v99
    %143 = vmatpush1.msra.mxu0 %v98
    %144 = vmatprep.subr.mxu0 %v103
    %145 = vmatpush1.msra.mxu0 %v102
    %146 = vmatprep.subr.mxu0 %v107
    %147 = vmatpush1.msra.mxu0 %v106
    %148 = vmatprep.subr.mxu0 %v111
    %149 = vmatpush1.msra.mxu0 %v110
    %150 = vmatprep.subr.mxu0 %v115
    %151 = vmatpush1.msra.mxu0 %v114
    %152 = vmatprep.subr.mxu0 %v119
    %153 = vmatpush1.msra.mxu0 %v118
    %154 = vmatprep.subr.mxu0 0.0
    %155 = vmatpush1.msra.mxu0 0.0
    %156 = vmatprep.subr.mxu0 0.0
    %157 = vmatpush1.msra.mxu0 0.0
    %158 = vmatprep.subr.mxu0 0.0
    %159 = vmatpush1.msra.mxu0 0.0
    %160 = vmatprep.subr.mxu0 0.0
    %161 = vmatpush1.msra.mxu0 0.0
    %162 = vmatprep.subr.mxu0 0.0
    %163 = vmatpush1.msra.mxu0 0.0
    %164 = vmatprep.subr.mxu0 0.0
    %165 = vmatpush1.msra.mxu0 0.0
    %166 = vmatprep.subr.mxu0 0.0
    %167 = vmatpush1.msra.mxu0 0.0
    %168 = vmatprep.subr.mxu0 0.0
    %169 = vmatpush1.msra.mxu0 0.0
    %170 = vmatprep.subr.mxu0 0.0
    %171 = vmatpush1.msra.mxu0 0.0
    %172 = vmatprep.subr.mxu0 0.0
    %173 = vmatpush1.msra.mxu0 0.0
    %174 = vmatprep.subr.mxu0 0.0
    %175 = vmatpush1.msra.mxu0 0.0
    %176 = vmatprep.subr.mxu0 0.0
    %177 = vmatpush1.msra.mxu0 0.0
    %178 = vmatprep.subr.mxu0 0.0
    %179 = vmatpush1.msra.mxu0 0.0
    %180 = vmatprep.subr.mxu0 0.0
    %181 = vmatpush1.msra.mxu0 0.0
    %182 = vmatprep.subr.mxu0 0.0
    %183 = vmatpush1.msra.mxu0 0.0
    %184 = vmatprep.subr.mxu0 0.0
    %185 = vmatpush1.msra.mxu0 0.0
    %186 = vmatprep.mubr.f32.mxu0 0.0
    %187 = vmatmul.mubr.f32.gmra.mrb[0].mxu0 %v56
    %v188 = vpop.f32.mrb[0].mxu0
    %v189 = vadd.f32 0.0, %v188
    %v190 = vpop.f32.mrb[0].mxu0
    %v191 = vadd.f32 0.0, %v190
    %192 = vmatprep.mubr.f32.mxu0 0.0
    %193 = vmatmul.mubr.f32.gmra.mrb[0].mxu0 %v57
    %v194 = vpop.f32.mrb[0].mxu0
    %v195 = vadd.f32 0.0, %v194
    %v196 = vpop.f32.mrb[0].mxu0
    %v197 = vadd.f32 0.0, %v196
    %198 = vdwg.mxu0
    %199 = vmatprep.subr.mxu0 %v61
    %200 = vmatpush1.msra.mxu0 %v60
    %201 = vmatprep.subr.mxu0 %v65
    %202 = vmatpush1.msra.mxu0 %v64
    %203 = vmatprep.subr.mxu0 %v69
    %204 = vmatpush1.msra.mxu0 %v68
    %205 = vmatprep.subr.mxu0 %v73
    %206 = vmatpush1.msra.mxu0 %v72
    %207 = vmatprep.subr.mxu0 %v77
    %208 = vmatpush1.msra.mxu0 %v76
    %209 = vmatprep.subr.mxu0 %v81
    %210 = vmatpush1.msra.mxu0 %v80
    %211 = vmatprep.subr.mxu0 %v85
    %212 = vmatpush1.msra.mxu0 %v84
    %213 = vmatprep.subr.mxu0 %v89
    %214 = vmatpush1.msra.mxu0 %v88
    %215 = vmatprep.subr.mxu0 %v93
    %216 = vmatpush1.msra.mxu0 %v92
    %217 = vmatprep.subr.mxu0 %v97
    %218 = vmatpush1.msra.mxu0 %v96
    %219 = vmatprep.subr.mxu0 %v101
    %220 = vmatpush1.msra.mxu0 %v100
    %221 = vmatprep.subr.mxu0 %v105
    %222 = vmatpush1.msra.mxu0 %v104
    %223 = vmatprep.subr.mxu0 %v109
    %224 = vmatpush1.msra.mxu0 %v108
    %225 = vmatprep.subr.mxu0 %v113
    %226 = vmatpush1.msra.mxu0 %v112
    %227 = vmatprep.subr.mxu0 %v117
    %228 = vmatpush1.msra.mxu0 %v116
    %229 = vmatprep.subr.mxu0 %v121
    %230 = vmatpush1.msra.mxu0 %v120
    %231 = vmatprep.subr.mxu0 0.0
    %232 = vmatpush1.msra.mxu0 0.0
    %233 = vmatprep.subr.mxu0 0.0
    %234 = vmatpush1.msra.mxu0 0.0
    %235 = vmatprep.subr.mxu0 0.0
    %236 = vmatpush1.msra.mxu0 0.0
    %237 = vmatprep.subr.mxu0 0.0
    %238 = vmatpush1.msra.mxu0 0.0
    %239 = vmatprep.subr.mxu0 0.0
    %240 = vmatpush1.msra.mxu0 0.0
    %241 = vmatprep.subr.mxu0 0.0
    %242 = vmatpush1.msra.mxu0 0.0
    %243 = vmatprep.subr.mxu0 0.0
    %244 = vmatpush1.msra.mxu0 0.0
    %245 = vmatprep.subr.mxu0 0.0
    %246 = vmatpush1.msra.mxu0 0.0
    %247 = vmatprep.subr.mxu0 0.0
    %248 = vmatpush1.msra.mxu0 0.0
    %249 = vmatprep.subr.mxu0 0.0
    %250 = vmatpush1.msra.mxu0 0.0
    %251 = vmatprep.subr.mxu0 0.0
    %252 = vmatpush1.msra.mxu0 0.0
    %253 = vmatprep.subr.mxu0 0.0
    %254 = vmatpush1.msra.mxu0 0.0
    %255 = vmatprep.subr.mxu0 0.0
    %256 = vmatpush1.msra.mxu0 0.0
    %257 = vmatprep.subr.mxu0 0.0
    %258 = vmatpush1.msra.mxu0 0.0
    %259 = vmatprep.subr.mxu0 0.0
    %260 = vmatpush1.msra.mxu0 0.0
    %261 = vmatprep.subr.mxu0 0.0
    %262 = vmatpush1.msra.mxu0 0.0
    %263 = vmatprep.mubr.f32.mxu0 0.0
    %264 = vmatmul.mubr.f32.gmra.mrb[0].mxu0 %v56
    %v265 = vpop.f32.mrb[0].mxu0
    %v266 = vadd.f32 0.0, %v265
    %v267 = vpop.f32.mrb[0].mxu0
    %v268 = vadd.f32 0.0, %v267
    %269 = vmatprep.mubr.f32.mxu0 0.0
    %270 = vmatmul.mubr.f32.gmra.mrb[0].mxu0 %v57
    %v271 = vpop.f32.mrb[0].mxu0
    %v272 = vadd.f32 0.0, %v271
    %v273 = vpop.f32.mrb[0].mxu0
    %v274 = vadd.f32 0.0, %v273
    %275 = vdwg.mxu0
    %v276 = vmax.f32 %v189, 0.0
    %v277 = vmax.f32 %v191, 0.0
    %v278 = vmax.f32 %v266, 0.0
    %v279 = vmax.f32 %v268, 0.0
    %v280 = vmax.f32 %v195, 0.0
    %v281 = vmax.f32 %v197, 0.0
    %v282 = vmax.f32 %v272, 0.0
    %v283 = vmax.f32 %v274, 0.0
    %v284 = vld [vmem:[#allocation7] sm:$0xff]
    %v285 = vld [vmem:[#allocation7 + $0x8] sm:$0xff]
    %v286 = vld [vmem:[#allocation7 + $0x10] sm:$0xff]
    %v287 = vld [vmem:[#allocation7 + $0x18] sm:$0xff]
    %v288 = vld [vmem:[#allocation7 + $0x20] sm:$0xff]
    %v289 = vld [vmem:[#allocation7 + $0x28] sm:$0xff]
    %v290 = vld [vmem:[#allocation7 + $0x30] sm:$0xff]
    %v291 = vld [vmem:[#allocation7 + $0x38] sm:$0xff]
    %v292 = vld [vmem:[#allocation7 + $0x40] sm:$0xff]
    %v293 = vld [vmem:[#allocation7 + $0x48] sm:$0xff]
    %v294 = vld [vmem:[#allocation7 + $0x50] sm:$0xff]
    %v295 = vld [vmem:[#allocation7 + $0x58] sm:$0xff]
    %v296 = vld [vmem:[#allocation7 + $0x60] sm:$0xff]
    %v297 = vld [vmem:[#allocation7 + $0x68] sm:$0xff]
    %v298 = vld [vmem:[#allocation7 + $0x70] sm:$0xff]
    %v299 = vld [vmem:[#allocation7 + $0x78] sm:$0xff]
    %v300 = vld [vmem:[#allocation7 + $0x80] sm:$0xff]
    %v301 = vld [vmem:[#allocation7 + $0x88] sm:$0xff]
    %v302 = vld [vmem:[#allocation7 + $0x90] sm:$0xff]
    %v303 = vld [vmem:[#allocation7 + $0x98] sm:$0xff]
    %v304 = vld [vmem:[#allocation7 + $0xa0] sm:$0xff]
    %v305 = vld [vmem:[#allocation7 + $0xa8] sm:$0xff]
    %v306 = vld [vmem:[#allocation7 + $0xb0] sm:$0xff]
    %v307 = vld [vmem:[#allocation7 + $0xb8] sm:$0xff]
    %v308 = vld [vmem:[#allocation7 + $0xc0] sm:$0xff]
    %v309 = vld [vmem:[#allocation7 + $0xc8] sm:$0xff]
    %v310 = vld [vmem:[#allocation7 + $0xd0] sm:$0xff]
    %v311 = vld [vmem:[#allocation7 + $0xd8] sm:$0xff]
    %v312 = vld [vmem:[#allocation7 + $0xe0] sm:$0xff]
    %v313 = vld [vmem:[#allocation7 + $0xe8] sm:$0xff]
    %v314 = vld [vmem:[#allocation7 + $0xf0] sm:$0xff]
    %v315 = vld [vmem:[#allocation7 + $0xf8] sm:$0xff]
    %v316 = vld [vmem:[#allocation7 + $0x100] sm:$0xff]
    %v317 = vld [vmem:[#allocation7 + $0x108] sm:$0xff]
    %v318 = vld [vmem:[#allocation7 + $0x110] sm:$0xff]
    %v319 = vld [vmem:[#allocation7 + $0x118] sm:$0xff]
    %v320 = vld [vmem:[#allocation7 + $0x120] sm:$0xff]
    %v321 = vld [vmem:[#allocation7 + $0x128] sm:$0xff]
    %v322 = vld [vmem:[#allocation7 + $0x130] sm:$0xff]
    %v323 = vld [vmem:[#allocation7 + $0x138] sm:$0xff]
    %v324 = vld [vmem:[#allocation7 + $0x140] sm:$0xff]
    %v325 = vld [vmem:[#allocation7 + $0x148] sm:$0xff]
    %v326 = vld [vmem:[#allocation7 + $0x150] sm:$0xff]
    %v327 = vld [vmem:[#allocation7 + $0x158] sm:$0xff]
    %v328 = vld [vmem:[#allocation7 + $0x160] sm:$0xff]
    %v329 = vld [vmem:[#allocation7 + $0x168] sm:$0xff]
    %v330 = vld [vmem:[#allocation7 + $0x170] sm:$0xff]
    %v331 = vld [vmem:[#allocation7 + $0x178] sm:$0xff]
    %v332 = vld [vmem:[#allocation7 + $0x180] sm:$0xff]
    %v333 = vld [vmem:[#allocation7 + $0x188] sm:$0xff]
    %v334 = vld [vmem:[#allocation7 + $0x190] sm:$0xff]
    %v335 = vld [vmem:[#allocation7 + $0x198] sm:$0xff]
    %v336 = vld [vmem:[#allocation7 + $0x1a0] sm:$0xff]
    %v337 = vld [vmem:[#allocation7 + $0x1a8] sm:$0xff]
    %v338 = vld [vmem:[#allocation7 + $0x1b0] sm:$0xff]
    %v339 = vld [vmem:[#allocation7 + $0x1b8] sm:$0xff]
    %v340 = vld [vmem:[#allocation7 + $0x1c0] sm:$0xff]
    %v341 = vld [vmem:[#allocation7 + $0x1c8] sm:$0xff]
    %v342 = vld [vmem:[#allocation7 + $0x1d0] sm:$0xff]
    %v343 = vld [vmem:[#allocation7 + $0x1d8] sm:$0xff]
    %v344 = vld [vmem:[#allocation7 + $0x1e0] sm:$0xff]
    %v345 = vld [vmem:[#allocation7 + $0x1e8] sm:$0xff]
    %v346 = vld [vmem:[#allocation7 + $0x1f0] sm:$0xff]
    %v347 = vld [vmem:[#allocation7 + $0x1f8] sm:$0xff]
    %348 = vmatprep.subr.mxu0 0.0
    %349 = vmatpush1.msra.mxu0 %v284
    %350 = vmatprep.subr.mxu0 0.0
    %351 = vmatpush1.msra.mxu0 %v285
    %352 = vmatprep.subr.mxu0 0.0
    %353 = vmatpush1.msra.mxu0 %v286
    %354 = vmatprep.subr.mxu0 0.0
    %355 = vmatpush1.msra.mxu0 %v287
    %356 = vmatprep.subr.mxu0 0.0
    %357 = vmatpush1.msra.mxu0 %v288
    %358 = vmatprep.subr.mxu0 0.0
    %359 = vmatpush1.msra.mxu0 %v289
    %360 = vmatprep.subr.mxu0 0.0
    %361 = vmatpush1.msra.mxu0 %v290
    %362 = vmatprep.subr.mxu0 0.0
    %363 = vmatpush1.msra.mxu0 %v291
    %364 = vmatprep.subr.mxu0 0.0
    %365 = vmatpush1.msra.mxu0 %v292
    %366 = vmatprep.subr.mxu0 0.0
    %367 = vmatpush1.msra.mxu0 %v293
    %368 = vmatprep.subr.mxu0 0.0
    %369 = vmatpush1.msra.mxu0 %v294
    %370 = vmatprep.subr.mxu0 0.0
    %371 = vmatpush1.msra.mxu0 %v295
    %372 = vmatprep.subr.mxu0 0.0
    %373 = vmatpush1.msra.mxu0 %v296
    %374 = vmatprep.subr.mxu0 0.0
    %375 = vmatpush1.msra.mxu0 %v297
    %376 = vmatprep.subr.mxu0 0.0
    %377 = vmatpush1.msra.mxu0 %v298
    %378 = vmatprep.subr.mxu0 0.0
    %379 = vmatpush1.msra.mxu0 %v299
    %380 = vmatprep.subr.mxu0 0.0
    %381 = vmatpush1.msra.mxu0 %v300
    %382 = vmatprep.subr.mxu0 0.0
    %383 = vmatpush1.msra.mxu0 %v301
    %384 = vmatprep.subr.mxu0 0.0
    %385 = vmatpush1.msra.mxu0 %v302
    %386 = vmatprep.subr.mxu0 0.0
    %387 = vmatpush1.msra.mxu0 %v303
    %388 = vmatprep.subr.mxu0 0.0
    %389 = vmatpush1.msra.mxu0 %v304
    %390 = vmatprep.subr.mxu0 0.0
    %391 = vmatpush1.msra.mxu0 %v305
    %392 = vmatprep.subr.mxu0 0.0
    %393 = vmatpush1.msra.mxu0 %v306
    %394 = vmatprep.subr.mxu0 0.0
    %395 = vmatpush1.msra.mxu0 %v307
    %396 = vmatprep.subr.mxu0 0.0
    %397 = vmatpush1.msra.mxu0 %v308
    %398 = vmatprep.subr.mxu0 0.0
    %399 = vmatpush1.msra.mxu0 %v309
    %400 = vmatprep.subr.mxu0 0.0
    %401 = vmatpush1.msra.mxu0 %v310
    %402 = vmatprep.subr.mxu0 0.0
    %403 = vmatpush1.msra.mxu0 %v311
    %404 = vmatprep.subr.mxu0 0.0
    %405 = vmatpush1.msra.mxu0 %v312
    %406 = vmatprep.subr.mxu0 0.0
    %407 = vmatpush1.msra.mxu0 %v313
    %408 = vmatprep.subr.mxu0 0.0
    %409 = vmatpush1.msra.mxu0 %v314
    %410 = vmatprep.subr.mxu0 0.0
    %411 = vmatpush1.msra.mxu0 %v315
    %412 = vmatprep.mubr.f32.mxu0 %v277
    %413 = vmatmul.mubr.f32.gmra.mrb[0].mxu0 %v276
    %v414 = vpop.f32.mrb[0].mxu0
    %v415 = vadd.f32 %v56, %v414
    %v416 = vpop.f32.mrb[0].mxu0
    %417 = vmatprep.mubr.f32.mxu0 %v281
    %418 = vmatmul.mubr.f32.gmra.mrb[0].mxu0 %v280
    %v419 = vpop.f32.mrb[0].mxu0
    %v420 = vadd.f32 %v57, %v419
    %v421 = vpop.f32.mrb[0].mxu0
    %422 = vdwg.mxu0
    %423 = vmatprep.subr.mxu0 0.0
    %424 = vmatpush1.msra.mxu0 %v316
    %425 = vmatprep.subr.mxu0 0.0
    %426 = vmatpush1.msra.mxu0 %v317
    %427 = vmatprep.subr.mxu0 0.0
    %428 = vmatpush1.msra.mxu0 %v318
    %429 = vmatprep.subr.mxu0 0.0
    %430 = vmatpush1.msra.mxu0 %v319
    %431 = vmatprep.subr.mxu0 0.0
    %432 = vmatpush1.msra.mxu0 %v320
    %433 = vmatprep.subr.mxu0 0.0
    %434 = vmatpush1.msra.mxu0 %v321
    %435 = vmatprep.subr.mxu0 0.0
    %436 = vmatpush1.msra.mxu0 %v322
    %437 = vmatprep.subr.mxu0 0.0
    %438 = vmatpush1.msra.mxu0 %v323
    %439 = vmatprep.subr.mxu0 0.0
    %440 = vmatpush1.msra.mxu0 %v324
    %441 = vmatprep.subr.mxu0 0.0
    %442 = vmatpush1.msra.mxu0 %v325
    %443 = vmatprep.subr.mxu0 0.0
    %444 = vmatpush1.msra.mxu0 %v326
    %445 = vmatprep.subr.mxu0 0.0
    %446 = vmatpush1.msra.mxu0 %v327
    %447 = vmatprep.subr.mxu0 0.0
    %448 = vmatpush1.msra.mxu0 %v328
    %449 = vmatprep.subr.mxu0 0.0
    %450 = vmatpush1.msra.mxu0 %v329
    %451 = vmatprep.subr.mxu0 0.0
    %452 = vmatpush1.msra.mxu0 %v330
    %453 = vmatprep.subr.mxu0 0.0
    %454 = vmatpush1.msra.mxu0 %v331
    %455 = vmatprep.subr.mxu0 0.0
    %456 = vmatpush1.msra.mxu0 %v332
    %457 = vmatprep.subr.mxu0 0.0
    %458 = vmatpush1.msra.mxu0 %v333
    %459 = vmatprep.subr.mxu0 0.0
    %460 = vmatpush1.msra.mxu0 %v334
    %461 = vmatprep.subr.mxu0 0.0
    %462 = vmatpush1.msra.mxu0 %v335
    %463 = vmatprep.subr.mxu0 0.0
    %464 = vmatpush1.msra.mxu0 %v336
    %465 = vmatprep.subr.mxu0 0.0
    %466 = vmatpush1.msra.mxu0 %v337
    %467 = vmatprep.subr.mxu0 0.0
    %468 = vmatpush1.msra.mxu0 %v338
    %469 = vmatprep.subr.mxu0 0.0
    %470 = vmatpush1.msra.mxu0 %v339
    %471 = vmatprep.subr.mxu0 0.0
    %472 = vmatpush1.msra.mxu0 %v340
    %473 = vmatprep.subr.mxu0 0.0
    %474 = vmatpush1.msra.mxu0 %v341
    %475 = vmatprep.subr.mxu0 0.0
    %476 = vmatpush1.msra.mxu0 %v342
    %477 = vmatprep.subr.mxu0 0.0
    %478 = vmatpush1.msra.mxu0 %v343
    %479 = vmatprep.subr.mxu0 0.0
    %480 = vmatpush1.msra.mxu0 %v344
    %481 = vmatprep.subr.mxu0 0.0
    %482 = vmatpush1.msra.mxu0 %v345
    %483 = vmatprep.subr.mxu0 0.0
    %484 = vmatpush1.msra.mxu0 %v346
    %485 = vmatprep.subr.mxu0 0.0
    %486 = vmatpush1.msra.mxu0 %v347
    %487 = vmatprep.mubr.f32.mxu0 %v279
    %488 = vmatmul.mubr.f32.gmra.mrb[0].mxu0 %v278
    %v489 = vpop.f32.mrb[0].mxu0
    %v490 = vadd.f32 %v415, %v489
    %v491 = vpop.f32.mrb[0].mxu0
    %492 = vmatprep.mubr.f32.mxu0 %v283
    %493 = vmatmul.mubr.f32.gmra.mrb[0].mxu0 %v282
    %v494 = vpop.f32.mrb[0].mxu0
    %v495 = vadd.f32 %v420, %v494
    %v496 = vpop.f32.mrb[0].mxu0
    %497 = vdwg.mxu0
    %498 = vadd.xlane.f32.xlu0 %v490
    %v499 = vpop.xlane.xlu0 %498
    %500 = vadd.xlane.f32.xlu0 %v495
    %v501 = vpop.xlane.xlu0 %500
    %v502 = vrcp.pop 128.0
    %v503 = vmul.f32 %v499, %v502
    %v504 = vmul.f32 %v501, %v502
    %v505 = vsub.f32 %v490, %v503
    %v506 = vsub.f32 %v495, %v504
    %v507 = vmul.f32 %v505, %v505
    %v508 = vmul.f32 %v506, %v506
    %509 = vadd.xlane.f32.xlu0 %v507
    %v510 = vpop.xlane.xlu0 %509
    %511 = vadd.xlane.f32.xlu0 %v508
    %v512 = vpop.xlane.xlu0 %511
    %v513 = vmul.f32 %v510, %v502
    %v514 = vmul.f32 %v512, %v502
    %v515 = vadd.f32 %v513, 1e-05
    %v516 = vadd.f32 %v514, 1e-05
    %v517 = vrsqrt.pop %v515
    %v518 = vrsqrt.pop %v516
    %v519 = vmul.f32 %v505, %v517
    %v520 = vmul.f32 %v506, %v518
    %521 = vst [vmem:[#allocation8] sm:$0xff] %v519
    %522 = vst [vmem:[#allocation8 + $0x8] sm:$0xff] %v520
    // Predicated region
    $region26: #{poswise_ffn.1} parent=1 // pred_check
      _
    $region27: #{poswise_ffn.1} parent=1 // pred_check_branch
      %524 = sbr.rel (0) target = $region29
    $region28: #{poswise_ffn.1} parent=1 // pred_region
      %s526 = ssub.s32 256, 256
      %527 = vsyncadd [#allocation4], %s526
      %s528 = sshll.u32 [#allocation8], 4
      %s529 = int_to_ptr.vmem [resolvable:$true] %s528
      %534 = dma.vmem_to_hbm [thread:$0]  %s529, 256, %s3, [#allocation4], 128, 128, 8
    $region29: #{poswise_ffn.1} parent=1 // pred_fallthru
      _
    // Predicated region
    $region30: #{poswise_ffn.1} parent=1 // pred_check
      _
    $region31: #{poswise_ffn.1} parent=1 // pred_check_branch
      %536 = sbr.rel (0) target = $region33
    $region32: #{poswise_ffn.1} parent=1 // pred_region
      %537 = dma.done [#allocation4], 256
    $region33: #{poswise_ffn.1} parent=1 // pred_fallthru
      _
    %538 = vsyncpa [#allocation3], 1
    %539 = vsyncpa [#allocation6], 1
    %540 = vsyncpa [#allocation4], 1

</llo_original>
